<compile_context>
chip_gen: v7x
topology: tpu7x:2x2x1
jax: 0.10.0
libtpu: 0.0.40
codegen_flags: <defaults>
</compile_context>

<pallas_src>
import functools

import jax
import jax.numpy as jnp
from jax.experimental import pallas as pl
from jax.experimental.pallas import tpu as pltpu


# ----------------------------------------------------------------------------
# Kernel body: one matmul + ReLU on the lane-dense folded operands.
# ----------------------------------------------------------------------------
def _head_dnn_kernel(f_ref, w_ref, o_ref):
    # f_ref: (tile_M, H*Din) bf16
    # w_ref: (H*Din, H*Dout) bf16, block-diagonal per head
    # o_ref: (tile_M, H*Dout) f32
    acc = jnp.dot(f_ref[...], w_ref[...], preferred_element_type=jnp.float32)
    o_ref[...] = jnp.maximum(acc, 0.0).astype(o_ref.dtype)


# ----------------------------------------------------------------------------
# Parameter preparation: run ONCE per parameter update, not per forward call.
# ----------------------------------------------------------------------------
def make_head_dnn_params(para):
    """para: (1, H, Din, Dout) f32 -> block-diagonal (H*Din, H*Dout) bf16."""
    _, H, Din, Dout = para.shape
    w = para[0].astype(jnp.bfloat16)                       # (H, Din, Dout)
    w_bd = jax.scipy.linalg.block_diag(*[w[h] for h in range(H)])
    return w_bd.reshape(H * Din, H * Dout)


# ----------------------------------------------------------------------------
# Forward with pre-built weight (the fast, cached path).
# ----------------------------------------------------------------------------
def head_dnn_forward_folded(feature, w_bd, *, tile_m=2048):
    """feature: (B, H, S, Din); w_bd: (H*Din, H*Dout) -> (B, H, S, Dout)."""
    B, H, S, Din = feature.shape
    K, N = w_bd.shape
    assert K == H * Din
    Dout = N // H
    M = B * S
    out_dtype = feature.dtype

    # Input fold (B,H,S,Din) -> (B,S,H,Din) -> (B*S, H*Din), bf16 for the MXU.
    # With allow_input_fusion this producer is fused into the pallas_call
    # (no separate XLA launch / HBM round trip under jit).
    f2d = jnp.transpose(feature, (0, 2, 1, 3)).reshape(M, K).astype(jnp.bfloat16)

    # Useful FLOPs only (the block-diagonal zero work is not counted).
    cost = pl.CostEstimate(
        flops=2 * B * S * H * Din * Dout,
        transcendentals=0,
        bytes_accessed=f2d.size * 2 + w_bd.size * 2 + M * N * 4,
    )

    use_grid = (M >= 4096) and (M % tile_m == 0)
    if use_grid:
        # Scaled path: shard M ("parallel" -> both v7x TensorCores), keep the
        # small weight resident across all grid steps (constant index_map).
        # Per-step VMEM: 2*(tile_m*K*2 + tile_m*N*4) + 2*K*N*2 bytes -- sized
        # to stay far below v7x's 64 MiB.
        out2d = pl.pallas_call(
            _head_dnn_kernel,
            out_shape=jax.ShapeDtypeStruct((M, N), jnp.float32),
            grid=(M // tile_m,),
            in_specs=[
                pl.BlockSpec((tile_m, K), lambda i: (i, 0)),
                pl.BlockSpec((K, N), lambda i: (0, 0)),   # resident weight
            ],
            out_specs=pl.BlockSpec((tile_m, N), lambda i: (i, 0)),
            compiler_params=pltpu.CompilerParams(
                dimension_semantics=("parallel",),
                allow_input_fusion=[True, False],
                vmem_limit_bytes=48 * 1024 * 1024,
            ),
            cost_estimate=cost,
        )(f2d, w_bd)
    else:
        # Toy/small path: single fused invocation, no grid overhead.
        out2d = pl.pallas_call(
            _head_dnn_kernel,
            out_shape=jax.ShapeDtypeStruct((M, N), jnp.float32),
            in_specs=[
                pl.BlockSpec(memory_space=pltpu.MemorySpace.VMEM),
                pl.BlockSpec(memory_space=pltpu.MemorySpace.VMEM),
            ],
            out_specs=pl.BlockSpec(memory_space=pltpu.MemorySpace.VMEM),
            compiler_params=pltpu.CompilerParams(
                allow_input_fusion=[True, False],
            ),
            cost_estimate=cost,
        )(f2d, w_bd)

    # Un-fold to the module's (B, H, S, Dout) layout.  Consumers that accept
    # the lane-dense (B*S, H*Dout) slab can use out2d directly and skip this.
    out = jnp.transpose(out2d.reshape(B, S, H, Dout), (0, 2, 1, 3))
    return out.astype(out_dtype)


# ----------------------------------------------------------------------------
# Convenience wrapper matching the module signature (builds the weight too).
# Prefer make_head_dnn_params + head_dnn_forward_folded when para is static.
# ----------------------------------------------------------------------------
def head_dnn_forward(feature, para):
    return head_dnn_forward_folded(feature, make_head_dnn_params(para))


def head_dnn_reference(feature, para):
    return jnp.maximum(jnp.matmul(feature, para), 0.0)


if __name__ == "__main__":
    key = jax.random.PRNGKey(0)
    k_feat, k_para = jax.random.split(key)

    # Small shapes consistent with the module's forward.
    batch, head, seq, in_dim, out_dim = 2, 4, 8, 32, 32

    feature = jax.random.normal(k_feat, (batch, head, seq, in_dim), dtype=jnp.float32)
    # nn.init.normal(mean=0, std=0.01) on para of shape (1, head, inDim, outDim)
    para = 0.01 * jax.random.normal(k_para, (1, head, in_dim, out_dim), dtype=jnp.float32)

    # Build the block-diagonal weight ONCE (per parameter update), outside the
    # per-call forward path.
    w_bd = jax.block_until_ready(make_head_dnn_params(para))

    fwd = jax.jit(functools.partial(head_dnn_forward_folded))
    out = jax.block_until_ready(fwd(feature, w_bd))

    ref = head_dnn_reference(feature, para)
    assert out.shape == (batch, head, seq, out_dim)
    # bf16 operand cast -> slightly loosened tolerance (f32 accumulate + ReLU).
    assert jnp.allclose(out, ref, atol=5e-3, rtol=2e-2)

    print("KERNEL_OK")
</pallas_src>

<mosaic_0001>
module attributes {stable_mosaic.version = 11 : i64} {
  func.func @_head_dnn_kernel(%arg0: memref<16x128xbf16, #tpu.memory_space<vmem>>, %arg1: memref<128x128xbf16, #tpu.memory_space<vmem>>, %arg2: memref<16x128xf32, #tpu.memory_space<vmem>>) attributes {dimension_semantics = [], scalar_prefetch = 0 : i64, scratch_operands = 0 : i64, tpu.core_type = #tpu.core_type<tc>} {
    %c0 = arith.constant 0 : index
    %c0_0 = arith.constant 0 : index
    %0 = vector.load %arg0[%c0, %c0_0] : memref<16x128xbf16, #tpu.memory_space<vmem>>, vector<16x128xbf16>
    %c0_1 = arith.constant 0 : index
    %c0_2 = arith.constant 0 : index
    %1 = vector.load %arg1[%c0_1, %c0_2] : memref<128x128xbf16, #tpu.memory_space<vmem>>, vector<128x128xbf16>
    %cst = arith.constant dense<0.000000e+00> : vector<16x128xf32>
    %2 = tpu.matmul %0, %1, %cst {dimension_numbers = #tpu.dot_dimension_numbers<[1], [0], [0], [1], [0, 0, 1, 1], [], []>} : vector<16x128xbf16>, vector<128x128xbf16>, vector<16x128xf32> -> vector<16x128xf32>
    %cst_3 = arith.constant 0.000000e+00 : f32
    %3 = vector.broadcast %cst_3 : f32 to vector<16x128xf32>
    %4 = arith.maximumf %2, %3 : vector<16x128xf32>
    %c0_4 = arith.constant 0 : index
    %c0_5 = arith.constant 0 : index
    %5 = vector.load %arg2[%c0_4, %c0_5] : memref<16x128xf32, #tpu.memory_space<vmem>>, vector<16x128xf32>
    tpu.vector_store %arg2[%c0_4, %c0_5], %4 {strides = array<i32>} : memref<16x128xf32, #tpu.memory_space<vmem>>, vector<16x128xf32>,
    return
  }
}

</mosaic_0001>

<llo_original>
// kernel: head_dnn_forward_folded.1
$region0: #{head_dnn_forward_folded.1}
  #allocation0 [shape = 'u32[]', space=smem, size = 0x4, offset = 0x4, fixed_abs, tag = 'smem constant byte address 0x4 - core index']
  #allocation1 [shape = 'u32[144,128]{1,0:T(1,128)}', space=vmem, size = 0x12000, scoped, tag = 'internal scratch']
  %s0 = inlined_call_operand.vmem [shape: bf16[16,128], index: 0, kind: input, shape index: {}]
  %s1 = inlined_call_operand.vmem [shape: bf16[128,128], index: 1, kind: input, shape index: {}]
  %s2 = inlined_call_operand.vmem [shape: f32[16,128], index: 2, kind: output, shape index: {}]
  %s3 = sld [smem:[#allocation0]]
  $region18: #{head_dnn_forward_folded.1} parent=0
    _
  %s5 = ssub.s32 1, %s3
  %s6 = scalar_select 0, %s5, %s3
  // Predicated region
  $region2: #{head_dnn_forward_folded.1} parent=0 // pred_check
    _
  $region3: #{head_dnn_forward_folded.1} parent=0 // pred_check_branch
    %8 = sbr.rel (0) target = $region5
  $region4: #{head_dnn_forward_folded.1} parent=0 // pred_region
    _
  $region5: #{head_dnn_forward_folded.1} parent=0 // pred_fallthru
    _
  // Predicated region
  $region6: #{head_dnn_forward_folded.1} parent=0 // pred_check
    _
  $region7: #{head_dnn_forward_folded.1} parent=0 // pred_check_branch
    %10 = sbr.rel (0) target = $region9
  $region8: #{head_dnn_forward_folded.1} parent=0 // pred_region
    _
  $region9: #{head_dnn_forward_folded.1} parent=0 // pred_fallthru
    _
  %v12 = vld [vmem:[%s0] sm:$0xf]
  %v13 = vld [vmem:[%s0 + $0x4] sm:$0xf]
  %v14 = vld [vmem:[%s1] sm:$0xf]
  %v15 = vld [vmem:[%s1 + $0x4] sm:$0xf]
  %v16 = vld [vmem:[%s1 + $0x8] sm:$0xf]
  %v17 = vld [vmem:[%s1 + $0xc] sm:$0xf]
  %v18 = vld [vmem:[%s1 + $0x10] sm:$0xf]
  %v19 = vld [vmem:[%s1 + $0x14] sm:$0xf]
  %v20 = vld [vmem:[%s1 + $0x18] sm:$0xf]
  %v21 = vld [vmem:[%s1 + $0x1c] sm:$0xf]
  %v22 = vld [vmem:[%s1 + $0x20] sm:$0xf]
  %v23 = vld [vmem:[%s1 + $0x24] sm:$0xf]
  %v24 = vld [vmem:[%s1 + $0x28] sm:$0xf]
  %v25 = vld [vmem:[%s1 + $0x2c] sm:$0xf]
  %v26 = vld [vmem:[%s1 + $0x30] sm:$0xf]
  %v27 = vld [vmem:[%s1 + $0x34] sm:$0xf]
  %v28 = vld [vmem:[%s1 + $0x38] sm:$0xf]
  %v29 = vld [vmem:[%s1 + $0x3c] sm:$0xf]
  %v32 = vunpack.c.l.b16 %v12
  %v33 = vunpack.c.l.b16 %v13
  %v34 = vpack.c.b16 %v33, %v32
  %v52 = vunpack.c.l.b16 %v14
  %v53 = vunpack.c.l.b16 %v15
  %v54 = vunpack.c.l.b16 %v16
  %v55 = vunpack.c.l.b16 %v17
  %v56 = vunpack.c.l.b16 %v18
  %v57 = vunpack.c.l.b16 %v19
  %v58 = vunpack.c.l.b16 %v20
  %v59 = vunpack.c.l.b16 %v21
  %v60 = vunpack.c.l.b16 %v22
  %v61 = vunpack.c.l.b16 %v23
  %v62 = vunpack.c.l.b16 %v24
  %v63 = vunpack.c.l.b16 %v25
  %v64 = vunpack.c.l.b16 %v26
  %v65 = vunpack.c.l.b16 %v27
  %v66 = vunpack.c.l.b16 %v28
  %v67 = vunpack.c.l.b16 %v29
  %v68 = vpack.c.b16 %v53, %v52
  %v69 = vpack.c.b16 %v55, %v54
  %v70 = vpack.c.b16 %v57, %v56
  %v71 = vpack.c.b16 %v59, %v58
  %v72 = vpack.c.b16 %v61, %v60
  %v73 = vpack.c.b16 %v63, %v62
  %v74 = vpack.c.b16 %v65, %v64
  %v75 = vpack.c.b16 %v67, %v66
  %84 = vmatprep.subr.bf16.mxu0 0
  %85 = vmatpush1.bf16.msra.mxu0 %v68
  %86 = vmatprep.subr.bf16.mxu0 0
  %87 = vmatpush1.bf16.msra.mxu0 %v69
  %88 = vmatprep.subr.bf16.mxu0 0
  %89 = vmatpush1.bf16.msra.mxu0 %v70
  %90 = vmatprep.subr.bf16.mxu0 0
  %91 = vmatpush1.bf16.msra.mxu0 %v71
  %92 = vmatprep.subr.bf16.mxu0 0
  %93 = vmatpush1.bf16.msra.mxu0 %v72
  %94 = vmatprep.subr.bf16.mxu0 0
  %95 = vmatpush1.bf16.msra.mxu0 %v73
  %96 = vmatprep.subr.bf16.mxu0 0
  %97 = vmatpush1.bf16.msra.mxu0 %v74
  %98 = vmatprep.subr.bf16.mxu0 0
  %99 = vmatpush1.bf16.msra.mxu0 %v75
  %100 = vmatprep.subr.bf16.mxu0 0
  %101 = vmatpush1.bf16.msra.mxu0 0
  %102 = vmatprep.subr.bf16.mxu0 0
  %103 = vmatpush1.bf16.msra.mxu0 0
  %104 = vmatprep.subr.bf16.mxu0 0
  %105 = vmatpush1.bf16.msra.mxu0 0
  %106 = vmatprep.subr.bf16.mxu0 0
  %107 = vmatpush1.bf16.msra.mxu0 0
  %108 = vmatprep.subr.bf16.mxu0 0
  %109 = vmatpush1.bf16.msra.mxu0 0
  %110 = vmatprep.subr.bf16.mxu0 0
  %111 = vmatpush1.bf16.msra.mxu0 0
  %112 = vmatprep.subr.bf16.mxu0 0
  %113 = vmatpush1.bf16.msra.mxu0 0
  %114 = vmatprep.subr.bf16.mxu0 0
  %115 = vmatpush1.bf16.msra.mxu0 0
  %116 = vmatprep.mubr.bf16.mxu0 0
  %117 = vmatmul.mubr.bf16.gmra.mrb[0].mxu0 %v34
  %v118 = vpop.f32.mrb[0].mxu0
  %v119 = vadd.f32 0.0, %v118
  %v120 = vpop.f32.mrb[0].mxu0
  %v121 = vpop.f32.mrb[0].mxu0
  %v122 = vadd.f32 0.0, %v121
  %v123 = vpop.f32.mrb[0].mxu0
  %124 = vdwg.mxu0
  %v125 = vmax.f32 %v119, 0.0
  %v126 = vmax.f32 %v122, 0.0
  %127 = vst [vmem:[%s2] sm:$0xff] %v125
  %128 = vst [vmem:[%s2 + $0x8] sm:$0xff] %v126
  // Predicated region
  $region10: #{head_dnn_forward_folded.1} parent=0 // pred_check
    _
  $region11: #{head_dnn_forward_folded.1} parent=0 // pred_check_branch
    %130 = sbr.rel (0) target = $region13
  $region12: #{head_dnn_forward_folded.1} parent=0 // pred_region
    _
  $region13: #{head_dnn_forward_folded.1} parent=0 // pred_fallthru
    _
  // Predicated region
  $region14: #{head_dnn_forward_folded.1} parent=0 // pred_check
    _
  $region15: #{head_dnn_forward_folded.1} parent=0 // pred_check_branch
    %132 = sbr.rel (0) target = $region17
  $region16: #{head_dnn_forward_folded.1} parent=0 // pred_region
    _
  $region17: #{head_dnn_forward_folded.1} parent=0 // pred_fallthru
    _

</llo_original>
